<compile_context>
chip_gen: v6e
topology: v6e:2x2x1
jax: 0.10.0
libtpu: 0.0.40
codegen_flags: <defaults>
</compile_context>

<pallas_src>
import jax
import jax.numpy as jnp
from jax.experimental import pallas as pl
from jax.experimental.pallas import tpu as pltpu

_LANE = 128
_SUBLANE = 8


def _round_up(n, m):
    return ((n + m - 1) // m) * m


# ---------------------------------------------------------------------------
# Kernels
# ---------------------------------------------------------------------------
def _linear_kernel(x_ref, w_ref, b_ref, o_ref):
    # x_ref: (tb, D), w_ref: (D, c_pad), b_ref: (1, C), o_ref: (tb, C)
    acc = jnp.dot(x_ref[...], w_ref[...], preferred_element_type=jnp.float32)
    c = o_ref.shape[-1]
    o_ref[...] = (acc[:, :c] + b_ref[...]).astype(o_ref.dtype)


def _linear_kernel_ktiled(x_ref, w_ref, b_ref, o_ref, acc_ref):
    # Grid: (batch tiles, K tiles). acc_ref: (tb, c_pad) f32 VMEM scratch.
    k = pl.program_id(1)

    @pl.when(k == 0)
    def _():
        acc_ref[...] = jnp.zeros_like(acc_ref)

    acc_ref[...] += jnp.dot(x_ref[...], w_ref[...],
                            preferred_element_type=jnp.float32)

    @pl.when(k == pl.num_programs(1) - 1)
    def _():
        c = o_ref.shape[-1]
        o_ref[...] = (acc_ref[:, :c] + b_ref[...]).astype(o_ref.dtype)


# ---------------------------------------------------------------------------
# One-time parameter preparation (hoisted out of the per-call path)
# ---------------------------------------------------------------------------
def prepare_linear_params(weight, bias, *, param_dtype=None):
    """Do ONCE per model, not per forward call.

    weight: (num_classes, input_size)  -- PyTorch nn.Linear layout
    bias:   (num_classes,)
    Returns (w_t, b_row):
      w_t:   (input_size, c_pad)  transposed, class axis zero-padded to a
             multiple of 128 lanes (clean MXU [K, N] operand).
      b_row: (1, num_classes)
    param_dtype=jnp.bfloat16 halves weight HBM traffic on v6e/v7x (the matmul
    still accumulates in f32); leave None for exact f32.
    """
    C, D = weight.shape
    if param_dtype is not None:
        weight = weight.astype(param_dtype)
    c_pad = _round_up(max(C, _LANE), _LANE)
    w_t = jnp.zeros((D, c_pad), dtype=weight.dtype).at[:, :C].set(weight.T)
    b_row = bias.reshape(1, C).astype(jnp.float32)
    return w_t, b_row


# ---------------------------------------------------------------------------
# Tile sizing against an explicit VMEM budget
# ---------------------------------------------------------------------------
def _vmem_budget_bytes():
    cap = 64 << 20  # conservative fallback: v7x physical VMEM per TensorCore
    try:
        info = pltpu.get_tpu_info()
        cap = int(getattr(info, "vmem_capacity_bytes", cap))
    except Exception:
        pass
    return (cap * 3) // 4  # leave headroom for compiler-internal scratch


def _tile_cost(tb, tk, D, C, c_pad, xb, wb):
    w_bytes = 2 * tk * c_pad * wb        # W^T blocks (double-buffer worst case)
    x_bytes = 2 * tb * tk * xb           # x blocks (double-buffered)
    o_bytes = 2 * tb * C * xb            # out blocks (double-buffered)
    acc_bytes = tb * c_pad * 4 if tk < D else 0
    b_bytes = 2 * C * 4
    return w_bytes + x_bytes + o_bytes + acc_bytes + b_bytes


def _choose_tiles(B, D, C, c_pad, xb, wb, budget, block_b):
    # Batch tile: biggest that fits (amortizes ~0.35us/step), capped at block_b.
    tb = min(block_b, _round_up(B, _SUBLANE))
    # Guarantee >=2 batch tiles when the batch is big enough to split, so the
    # "parallel" axis spans both v7x TensorCores.
    if B > 2 * _SUBLANE and tb >= B:
        tb = _round_up(-(-B // 2), _SUBLANE)

    if _tile_cost(tb, D, D, C, c_pad, xb, wb) <= budget:
        return tb, D  # full-D blocks fit: no K tiling needed

    # Prefer K tiling over shrinking the batch tile (keeps the MXU fed).
    for tk in (4096, 2048, 1024, 512, 256, 128):
        if tk < D and D % tk == 0 and _tile_cost(tb, tk, D, C, c_pad, xb, wb) <= budget:
            return tb, tk

    # Last resort: shrink the batch tile.
    tk_opts = [t for t in (128, 256, 512) if t < D and D % t == 0]
    tk = tk_opts[0] if tk_opts else D
    while tb > _SUBLANE and _tile_cost(tb, tk, D, C, c_pad, xb, wb) > budget:
        tb = max(_SUBLANE, _round_up(tb // 2, _SUBLANE))
    return tb, tk


# ---------------------------------------------------------------------------
# Forward
# ---------------------------------------------------------------------------
def logistic_regression_forward(x, w_t, b_row, *, block_b=1024,
                                vmem_budget_bytes=None):
    """out = x @ W^T + b, with (w_t, b_row) from prepare_linear_params.

    x:     (B, input_size)
    w_t:   (input_size, c_pad)
    b_row: (1, num_classes)
    returns (B, num_classes)
    """
    B, D = x.shape
    D2, c_pad = w_t.shape
    assert D == D2
    C = b_row.shape[-1]

    budget = vmem_budget_bytes if vmem_budget_bytes is not None else _vmem_budget_bytes()
    tb, tk = _choose_tiles(B, D, C, c_pad, x.dtype.itemsize,
                           w_t.dtype.itemsize, budget, block_b)
    vmem_limit = int(_tile_cost(tb, tk, D, C, c_pad, x.dtype.itemsize,
                                w_t.dtype.itemsize)) + (4 << 20)

    n_b = pl.cdiv(B, tb)  # ragged last block handled by Pallas (no x pre-pad)

    if tk == D:
        out = pl.pallas_call(
            _linear_kernel,
            out_shape=jax.ShapeDtypeStruct((B, C), x.dtype),
            grid=(n_b,),
            in_specs=[
                pl.BlockSpec((tb, D), lambda i: (i, 0)),      # x: streamed per tile
                pl.BlockSpec((D, c_pad), lambda i: (0, 0)),   # W^T: VMEM-resident
                pl.BlockSpec((1, C), lambda i: (0, 0)),       # bias: VMEM-resident
            ],
            out_specs=pl.BlockSpec((tb, C), lambda i: (i, 0)),
            compiler_params=pltpu.CompilerParams(
                dimension_semantics=("parallel",),
                vmem_limit_bytes=vmem_limit,
            ),
        )(x, w_t, b_row)
    else:
        out = pl.pallas_call(
            _linear_kernel_ktiled,
            out_shape=jax.ShapeDtypeStruct((B, C), x.dtype),
            grid=(n_b, D // tk),
            in_specs=[
                pl.BlockSpec((tb, tk), lambda i, k: (i, k)),
                pl.BlockSpec((tk, c_pad), lambda i, k: (k, 0)),
                pl.BlockSpec((1, C), lambda i, k: (0, 0)),
            ],
            out_specs=pl.BlockSpec((tb, C), lambda i, k: (i, 0)),
            scratch_shapes=[pltpu.VMEM((tb, c_pad), jnp.float32)],
            compiler_params=pltpu.CompilerParams(
                dimension_semantics=("parallel", "arbitrary"),
                vmem_limit_bytes=vmem_limit,
            ),
        )(x, w_t, b_row)

    return out


if __name__ == "__main__":
    # Small shapes consistent with the module: batch=8, input_size=256, num_classes=16
    B, INPUT_SIZE, NUM_CLASSES = 8, 256, 16

    key = jax.random.PRNGKey(0)
    kx, kw, kb = jax.random.split(key, 3)

    # PyTorch-like uniform(-1/sqrt(D), 1/sqrt(D)) init.
    bound = 1.0 / (INPUT_SIZE ** 0.5)
    weight = jax.random.uniform(
        kw, (NUM_CLASSES, INPUT_SIZE), jnp.float32, -bound, bound
    )
    bias = jax.random.uniform(kb, (NUM_CLASSES,), jnp.float32, -bound, bound)
    x = jax.random.normal(kx, (B, INPUT_SIZE), jnp.float32)

    # One-time prep (transpose + lane-pad), hoisted out of the forward path.
    w_t, b_row = prepare_linear_params(weight, bias)

    fwd = jax.jit(logistic_regression_forward)
    out = fwd(x, w_t, b_row)
    jax.block_until_ready(out)

    # Correctness check against plain-JAX reference (the PyTorch module applies
    # no activation in forward()).
    ref = x @ weight.T + bias
    assert out.shape == (B, NUM_CLASSES)
    assert jnp.allclose(out, ref, atol=1e-5, rtol=1e-5)

    print("KERNEL_OK")
</pallas_src>

<mosaic_0001>
module attributes {stable_mosaic.version = 11 : i64} {
  func.func @_linear_kernel(%arg0: i32, %arg1: memref<8x256xf32, #tpu.memory_space<vmem>>, %arg2: memref<256x128xf32, #tpu.memory_space<vmem>>, %arg3: memref<1x16xf32, #tpu.memory_space<vmem>>, %arg4: memref<8x16xf32, #tpu.memory_space<vmem>>) attributes {dimension_semantics = [#tpu.dimension_semantics<parallel>], iteration_bounds = array<i64: 1>, scalar_prefetch = 0 : i64, scratch_operands = 0 : i64, tpu.core_type = #tpu.core_type<tc>, window_params = [{transform_indices = @transform_0, window_bounds = array<i64: 8, 256>}, {pipeline_mode = #tpu.pipeline_mode<synchronous>, transform_indices = @transform_1, window_bounds = array<i64: 256, 128>}, {pipeline_mode = #tpu.pipeline_mode<synchronous>, transform_indices = @transform_2, window_bounds = array<i64: 1, 16>}, {transform_indices = @transform_3, window_bounds = array<i64: 8, 16>}]} {
    %c0 = arith.constant 0 : index
    %c0_0 = arith.constant 0 : index
    %0 = vector.load %arg1[%c0, %c0_0] : memref<8x256xf32, #tpu.memory_space<vmem>>, vector<8x256xf32>
    %c0_1 = arith.constant 0 : index
    %c0_2 = arith.constant 0 : index
    %1 = vector.load %arg2[%c0_1, %c0_2] : memref<256x128xf32, #tpu.memory_space<vmem>>, vector<256x128xf32>
    %cst = arith.constant dense<0.000000e+00> : vector<8x128xf32>
    %2 = tpu.matmul %0, %1, %cst {dimension_numbers = #tpu.dot_dimension_numbers<[1], [0], [0], [1], [0, 0, 1, 1], [], []>} : vector<8x256xf32>, vector<256x128xf32>, vector<8x128xf32> -> vector<8x128xf32>
    %3 = vector.extract_strided_slice %2 {offsets = [0, 0], sizes = [8, 16], strides = [1, 1]} : vector<8x128xf32> to vector<8x16xf32>
    %c0_3 = arith.constant 0 : index
    %c0_4 = arith.constant 0 : index
    %4 = vector.load %arg3[%c0_3, %c0_4] : memref<1x16xf32, #tpu.memory_space<vmem>>, vector<1x16xf32>
    %5 = vector.broadcast %4 : vector<1x16xf32> to vector<8x16xf32>
    %6 = arith.addf %3, %5 : vector<8x16xf32>
    %c0_5 = arith.constant 0 : index
    %c0_6 = arith.constant 0 : index
    %7 = vector.load %arg4[%c0_5, %c0_6] : memref<8x16xf32, #tpu.memory_space<vmem>>, vector<8x16xf32>
    tpu.vector_store %arg4[%c0_5, %c0_6], %6 {strides = array<i32>} : memref<8x16xf32, #tpu.memory_space<vmem>>, vector<8x16xf32>,
    return
  }
  func.func @transform_0(%arg0: i32) -> (i32, i32) {
    %c0_i32 = arith.constant 0 : i32
    %c0_i32_0 = arith.constant 0 : i32
    return %arg0, %c0_i32 : i32, i32
  }
  func.func @transform_1(%arg0: i32) -> (i32, i32) {
    %c0_i32 = arith.constant 0 : i32
    %c0_i32_0 = arith.constant 0 : i32
    %c0_i32_1 = arith.constant 0 : i32
    return %c0_i32, %c0_i32_0 : i32, i32
  }
  func.func @transform_2(%arg0: i32) -> (i32, i32) {
    %c0_i32 = arith.constant 0 : i32
    %c0_i32_0 = arith.constant 0 : i32
    %c0_i32_1 = arith.constant 0 : i32
    return %c0_i32, %c0_i32_0 : i32, i32
  }
  func.func @transform_3(%arg0: i32) -> (i32, i32) {
    %c0_i32 = arith.constant 0 : i32
    %c0_i32_0 = arith.constant 0 : i32
    return %arg0, %c0_i32 : i32, i32
  }
}

</mosaic_0001>

<llo_original>
// kernel: logistic_regression_forward.1
$region0: #{logistic_regression_forward.1}
  #allocation0 [shape = 'u32[]', space=smem, size = 0x4, offset = 0x4, fixed_abs, tag = 'smem constant byte address 0x4 - core index']
  #allocation1 [shape = 'u32[144,128]{1,0:T(1,128)}', space=vmem, size = 0x12000, scoped, tag = 'internal scratch']
  %s0 = inlined_call_operand.hbm [shape: f32[8,256], index: 0, kind: input, shape index: {}]
  %s1 = inlined_call_operand.hbm [shape: f32[256,128], index: 1, kind: input, shape index: {}]
  %s2 = inlined_call_operand.vmem [shape: f32[1,16], index: 2, kind: input, shape index: {}]
  %s3 = inlined_call_operand.hbm [shape: f32[8,16], index: 3, kind: output, shape index: {}]
  %s4 = sld [smem:[#allocation0]]
  $region30: #{logistic_regression_forward.1} parent=0
    _
  %s6 = ssub.s32 1, %s4
  %s7 = scalar_select 0, %s6, %s4
  $region1: #{logistic_regression_forward.1} parent=0
    #allocation2 [shape = 'u8[8192]{0}', space=vmem, size = 0x2000, scoped, tag = 'input window, operand 0, single buffered']
    #allocation3 [shape = 's32[1]{0}', space=sflag, size = 0x4, scoped, tag = 'scoped memory for logistic_regression_forward.1']
    #allocation4 [shape = 's32[1]{0}', space=sflag, size = 0x4, scoped, tag = 'scoped memory for logistic_regression_forward.1']
    #allocation5 [shape = 'u8[131072]{0}', space=vmem, size = 0x20000, scoped, tag = 'input window, operand 1, single buffered']
    #allocation6 [shape = 's32[1]{0}', space=sflag, size = 0x4, scoped, tag = 'scoped memory for logistic_regression_forward.1']
    #allocation7 [shape = 'u8[4096]{0}', space=vmem, size = 0x1000, scoped, tag = 'output window, operand 0, single buffered']
    %8 = vsyncpa [#allocation3], 0
    %9 = vsyncpa [#allocation6], 0
    %10 = vsyncpa [#allocation4], 0
    // Predicated region
    $region2: #{logistic_regression_forward.1} parent=1 // pred_check
      _
    $region3: #{logistic_regression_forward.1} parent=1 // pred_check_branch
      %12 = sbr.rel (0) target = $region5
    $region4: #{logistic_regression_forward.1} parent=1 // pred_region
      %s14 = ssub.s32 256, 256
      %15 = vsyncadd [#allocation3], %s14
      %s17 = sshll.u32 [#allocation2], 4
      %s18 = int_to_ptr.vmem [resolvable:$true] %s17
      %20 = dma.hbm_to_vmem [thread:$0]  %s0, 256, %s18, [#allocation3]
    $region5: #{logistic_regression_forward.1} parent=1 // pred_fallthru
      _
    // Predicated region
    $region6: #{logistic_regression_forward.1} parent=1 // pred_check
      _
    $region7: #{logistic_regression_forward.1} parent=1 // pred_check_branch
      %22 = sbr.rel (0) target = $region9
    $region8: #{logistic_regression_forward.1} parent=1 // pred_region
      %s24 = ssub.s32 4096, 4096
      %25 = vsyncadd [#allocation6], %s24
      %s26 = sshll.u32 [#allocation5], 4
      %s27 = int_to_ptr.vmem [resolvable:$true] %s26
      %32 = dma.hbm_to_vmem [thread:$0]  %s1, 4096, %s27, [#allocation6], 128, 128, 8
    $region9: #{logistic_regression_forward.1} parent=1 // pred_fallthru
      _
    // Predicated region
    $region10: #{logistic_regression_forward.1} parent=1 // pred_check
      _
    $region11: #{logistic_regression_forward.1} parent=1 // pred_check_branch
      %34 = sbr.rel (0) target = $region13
    $region12: #{logistic_regression_forward.1} parent=1 // pred_region
      _
    $region13: #{logistic_regression_forward.1} parent=1 // pred_fallthru
      _
    // Predicated region
    $region14: #{logistic_regression_forward.1} parent=1 // pred_check
      _
    $region15: #{logistic_regression_forward.1} parent=1 // pred_check_branch
      %36 = sbr.rel (0) target = $region17
    $region16: #{logistic_regression_forward.1} parent=1 // pred_region
      %37 = dma.done [#allocation3], 256
    $region17: #{logistic_regression_forward.1} parent=1 // pred_fallthru
      _
    // Predicated region
    $region18: #{logistic_regression_forward.1} parent=1 // pred_check
      _
    $region19: #{logistic_regression_forward.1} parent=1 // pred_check_branch
      %39 = sbr.rel (0) target = $region21
    $region20: #{logistic_regression_forward.1} parent=1 // pred_region
      %40 = dma.done [#allocation6], 4096
    $region21: #{logistic_regression_forward.1} parent=1 // pred_fallthru
      _
    %v41 = vld [vmem:[#allocation2] sm:$0xff]
    %v42 = vld [vmem:[#allocation2 + $0x8] sm:$0xff]
    %v43 = vld [vmem:[#allocation5] sm:$0xff]
    %v44 = vld [vmem:[#allocation5 + $0x8] sm:$0xff]
    %v45 = vld [vmem:[#allocation5 + $0x10] sm:$0xff]
    %v46 = vld [vmem:[#allocation5 + $0x18] sm:$0xff]
    %v47 = vld [vmem:[#allocation5 + $0x20] sm:$0xff]
    %v48 = vld [vmem:[#allocation5 + $0x28] sm:$0xff]
    %v49 = vld [vmem:[#allocation5 + $0x30] sm:$0xff]
    %v50 = vld [vmem:[#allocation5 + $0x38] sm:$0xff]
    %v51 = vld [vmem:[#allocation5 + $0x40] sm:$0xff]
    %v52 = vld [vmem:[#allocation5 + $0x48] sm:$0xff]
    %v53 = vld [vmem:[#allocation5 + $0x50] sm:$0xff]
    %v54 = vld [vmem:[#allocation5 + $0x58] sm:$0xff]
    %v55 = vld [vmem:[#allocation5 + $0x60] sm:$0xff]
    %v56 = vld [vmem:[#allocation5 + $0x68] sm:$0xff]
    %v57 = vld [vmem:[#allocation5 + $0x70] sm:$0xff]
    %v58 = vld [vmem:[#allocation5 + $0x78] sm:$0xff]
    %v59 = vld [vmem:[#allocation5 + $0x80] sm:$0xff]
    %v60 = vld [vmem:[#allocation5 + $0x88] sm:$0xff]
    %v61 = vld [vmem:[#allocation5 + $0x90] sm:$0xff]
    %v62 = vld [vmem:[#allocation5 + $0x98] sm:$0xff]
    %v63 = vld [vmem:[#allocation5 + $0xa0] sm:$0xff]
    %v64 = vld [vmem:[#allocation5 + $0xa8] sm:$0xff]
    %v65 = vld [vmem:[#allocation5 + $0xb0] sm:$0xff]
    %v66 = vld [vmem:[#allocation5 + $0xb8] sm:$0xff]
    %v67 = vld [vmem:[#allocation5 + $0xc0] sm:$0xff]
    %v68 = vld [vmem:[#allocation5 + $0xc8] sm:$0xff]
    %v69 = vld [vmem:[#allocation5 + $0xd0] sm:$0xff]
    %v70 = vld [vmem:[#allocation5 + $0xd8] sm:$0xff]
    %v71 = vld [vmem:[#allocation5 + $0xe0] sm:$0xff]
    %v72 = vld [vmem:[#allocation5 + $0xe8] sm:$0xff]
    %v73 = vld [vmem:[#allocation5 + $0xf0] sm:$0xff]
    %v74 = vld [vmem:[#allocation5 + $0xf8] sm:$0xff]
    %75 = vmatprep.subr.mxu0 0.0
    %76 = vmatpush1.msra.mxu0 %v58
    %77 = vmatprep.subr.mxu0 0.0
    %78 = vmatpush1.msra.mxu0 %v57
    %79 = vmatprep.subr.mxu0 0.0
    %80 = vmatpush1.msra.mxu0 %v56
    %81 = vmatprep.subr.mxu0 0.0
    %82 = vmatpush1.msra.mxu0 %v55
    %83 = vmatprep.subr.mxu0 0.0
    %84 = vmatpush1.msra.mxu0 %v54
    %85 = vmatprep.subr.mxu0 0.0
    %86 = vmatpush1.msra.mxu0 %v53
    %87 = vmatprep.subr.mxu0 0.0
    %88 = vmatpush1.msra.mxu0 %v52
    %89 = vmatprep.subr.mxu0 0.0
    %90 = vmatpush1.msra.mxu0 %v51
    %91 = vmatprep.subr.mxu0 0.0
    %92 = vmatpush1.msra.mxu0 %v50
    %93 = vmatprep.subr.mxu0 0.0
    %94 = vmatpush1.msra.mxu0 %v49
    %95 = vmatprep.subr.mxu0 0.0
    %96 = vmatpush1.msra.mxu0 %v48
    %97 = vmatprep.subr.mxu0 0.0
    %98 = vmatpush1.msra.mxu0 %v47
    %99 = vmatprep.subr.mxu0 0.0
    %100 = vmatpush1.msra.mxu0 %v46
    %101 = vmatprep.subr.mxu0 0.0
    %102 = vmatpush1.msra.mxu0 %v45
    %103 = vmatprep.subr.mxu0 0.0
    %104 = vmatpush1.msra.mxu0 %v44
    %105 = vmatprep.subr.mxu0 0.0
    %106 = vmatpush1.msra.mxu0 %v43
    %107 = vmatprep.subr.mxu0 0.0
    %108 = vmatpush2.msra.mxu0 %v74
    %109 = vmatprep.subr.mxu0 0.0
    %110 = vmatpush2.msra.mxu0 %v73
    %111 = vmatprep.subr.mxu0 0.0
    %112 = vmatpush2.msra.mxu0 %v72
    %113 = vmatprep.subr.mxu0 0.0
    %114 = vmatpush2.msra.mxu0 %v71
    %115 = vmatprep.subr.mxu0 0.0
    %116 = vmatpush2.msra.mxu0 %v70
    %117 = vmatprep.subr.mxu0 0.0
    %118 = vmatpush2.msra.mxu0 %v69
    %119 = vmatprep.subr.mxu0 0.0
    %120 = vmatpush2.msra.mxu0 %v68
    %121 = vmatprep.subr.mxu0 0.0
    %122 = vmatpush2.msra.mxu0 %v67
    %123 = vmatprep.subr.mxu0 0.0
    %124 = vmatpush2.msra.mxu0 %v66
    %125 = vmatprep.subr.mxu0 0.0
    %126 = vmatpush2.msra.mxu0 %v65
    %127 = vmatprep.subr.mxu0 0.0
    %128 = vmatpush2.msra.mxu0 %v64
    %129 = vmatprep.subr.mxu0 0.0
    %130 = vmatpush2.msra.mxu0 %v63
    %131 = vmatprep.subr.mxu0 0.0
    %132 = vmatpush2.msra.mxu0 %v62
    %133 = vmatprep.subr.mxu0 0.0
    %134 = vmatpush2.msra.mxu0 %v61
    %135 = vmatprep.subr.mxu0 0.0
    %136 = vmatpush2.msra.mxu0 %v60
    %137 = vmatprep.subr.mxu0 0.0
    %138 = vmatpush2.msra.mxu0 %v59
    %139 = vmatprep.mubr.f32.mxu0 %v42
    %140 = vmatmul.mubr.f32.gmra.mxu0 %v41
    %v141 = vpop.f32.mrf.mxu0
    %v142 = vadd.f32 0.0, %v141
    %v143 = vpop.f32.mrf.mxu0
    %144 = vdwg.mxu0
    %v145 = vld [vmem:[%s2] sm:$0x1]
    %v147 = vlaneseq
    %v148 = vshrl.u32 %v147, 7
    %v149 = vsub.s32 0, %v148
    %v150 = vrot.slane %v145, %v149
    %v152 = vadd.f32 %v142, %v150
    %vm153 = vcmask 130048
    %154 = vst.msk [vmem:[#allocation7] sm:$0xff] %vm153, %v152
    // Predicated region
    $region22: #{logistic_regression_forward.1} parent=1 // pred_check
      _
    $region23: #{logistic_regression_forward.1} parent=1 // pred_check_branch
      %156 = sbr.rel (0) target = $region25
    $region24: #{logistic_regression_forward.1} parent=1 // pred_region
      %s158 = ssub.s32 128, 128
      %159 = vsyncadd [#allocation4], %s158
      %s161 = sshll.u32 [#allocation7], 4
      %s162 = int_to_ptr.vmem [resolvable:$true] %s161
      %164 = dma.vmem_to_hbm [thread:$0]  %s162, 128, %s3, [#allocation4]
    $region25: #{logistic_regression_forward.1} parent=1 // pred_fallthru
      _
    // Predicated region
    $region26: #{logistic_regression_forward.1} parent=1 // pred_check
      _
    $region27: #{logistic_regression_forward.1} parent=1 // pred_check_branch
      %166 = sbr.rel (0) target = $region29
    $region28: #{logistic_regression_forward.1} parent=1 // pred_region
      %167 = dma.done [#allocation4], 128
    $region29: #{logistic_regression_forward.1} parent=1 // pred_fallthru
      _
    %168 = vsyncpa [#allocation3], 1
    %169 = vsyncpa [#allocation6], 1
    %170 = vsyncpa [#allocation4], 1

</llo_original>
